<compile_context>
chip_gen: v6e
topology: v6e:2x2x1
jax: 0.10.0
libtpu: 0.0.40
codegen_flags: <defaults>
</compile_context>

<pallas_src>
import jax
import jax.numpy as jnp
from jax.experimental import pallas as pl
from jax.experimental.pallas import tpu as pltpu

_TARGET_BLOCK_BYTES = 2 * 1024 * 1024   # per-array, per-buffer block budget


def _tanh_kernel(kk_ref, bias_ref, x_ref, o_ref):
    kk = kk_ref[0]
    bias = bias_ref[0]
    xf = x_ref[...].astype(jnp.float32)          # in-register cast only
    o_ref[...] = (jnp.tanh(xf * kk) + bias).astype(o_ref.dtype)


def _sign_kernel(kk_ref, bias_ref, x_ref, o_ref):
    del kk_ref
    bias = bias_ref[0]
    xf = x_ref[...].astype(jnp.float32)
    o_ref[...] = (jnp.sign(xf) + bias).astype(o_ref.dtype)


def _select_kernel(kk_ref, bias_ref, x_ref, o_ref):
    # Fallback when kk is a traced scalar: select inside the kernel.
    kk = kk_ref[0]
    bias = bias_ref[0]
    xf = x_ref[...].astype(jnp.float32)
    o_ref[...] = (jnp.where(kk < 1000000.0, jnp.tanh(xf * kk), jnp.sign(xf))
                  + bias).astype(o_ref.dtype)


def _slab_geometry(total, itemsize):
    """Pick a lane-dense slab [rows, lanes] and a sublane-aligned row block."""
    if total % 128 == 0:
        # Pad-free path: largest lane width that divides the element count.
        lanes = 128
        for cand in (1024, 512, 256):
            if total % cand == 0:
                lanes = cand
                break
        padded_total = total
    else:
        # Padding unavoidable; use a comfortable 512-lane slab.
        lanes = 512
        padded_total = ((total + lanes - 1) // lanes) * lanes
    rows = padded_total // lanes

    # Row block from a byte budget (dtype aware), multiple of 8 sublanes.
    budget_rows = max(8, (_TARGET_BLOCK_BYTES // (lanes * itemsize)) // 8 * 8)
    if rows <= budget_rows:
        block_rows = rows            # single block == full array dim (legal)
    else:
        block_rows = budget_rows     # multiple of 8; last block masked by grid
    return lanes, rows, padded_total, block_rows


def binary_activation(x, kk, bias):
    """Pallas TPU implementation of BinaryActivation.forward.

    x:    any-shape float array (NCHW in the example), any float dtype.
    kk:   scalar slope parameter (Python float / 0-d array / traced scalar).
    bias: scalar bias added to the activation.
    """
    orig_shape = x.shape
    total = x.size
    io_dtype = x.dtype
    itemsize = jnp.dtype(io_dtype).itemsize

    lanes, rows, padded_total, block_rows = _slab_geometry(total, itemsize)

    x_flat = x.reshape(-1)
    if padded_total != total:
        x_flat = jnp.pad(x_flat, (0, padded_total - total))
    x2d = x_flat.reshape(rows, lanes)

    # Resolve the kk branch at trace time when possible (only one transcendental
    # path is emitted); otherwise select inside the kernel.
    try:
        kernel = _tanh_kernel if float(kk) < 1000000.0 else _sign_kernel
    except (TypeError, jax.errors.ConcretizationTypeError):
        kernel = _select_kernel

    kk_arr = jnp.asarray(kk, dtype=jnp.float32).reshape(1)
    bias_arr = jnp.asarray(bias, dtype=jnp.float32).reshape(1)

    grid = (pl.cdiv(rows, block_rows),)
    out2d = pl.pallas_call(
        kernel,
        out_shape=jax.ShapeDtypeStruct((rows, lanes), io_dtype),
        grid=grid,
        in_specs=[
            pl.BlockSpec(memory_space=pltpu.SMEM),                 # kk
            pl.BlockSpec(memory_space=pltpu.SMEM),                 # bias
            pl.BlockSpec((block_rows, lanes), lambda i: (i, 0)),   # x tile
        ],
        out_specs=pl.BlockSpec((block_rows, lanes), lambda i: (i, 0)),
        compiler_params=pltpu.CompilerParams(
            dimension_semantics=("parallel",)),
    )(kk_arr, bias_arr, x2d)

    out_flat = out2d.reshape(-1)
    if padded_total != total:
        out_flat = out_flat[:total]
    return out_flat.reshape(orig_shape)


if __name__ == "__main__":
    key = jax.random.PRNGKey(0)
    # NCHW input, small shapes: batch=2, channels=4, spatial=16x16
    x = jax.random.normal(key, (2, 4, 16, 16), dtype=jnp.float32)

    # Deterministic "parameters" matching BinaryActivation.__init__:
    # bias = 1.0, kk = 1.0 (ker_bias only affects grad flow, irrelevant fwd)
    bias = 1.0
    kk = 1.0

    # Branch 1: kk < 1e6  -> tanh(x * kk) + bias
    out_tanh = jax.block_until_ready(binary_activation(x, kk, bias))
    ref_tanh = jnp.tanh(x * kk) + bias
    assert out_tanh.shape == x.shape and out_tanh.dtype == x.dtype
    assert jnp.allclose(out_tanh, ref_tanh, atol=1e-6), "tanh branch mismatch"

    # Branch 2: kk >= 1e6 -> sign(x) + bias
    kk_big = 2000000.0
    out_sign = jax.block_until_ready(binary_activation(x, kk_big, bias))
    ref_sign = jnp.sign(x) + bias
    assert jnp.allclose(out_sign, ref_sign, atol=1e-6), "sign branch mismatch"

    # bf16 input (I/O stays bf16; compute in f32 in-register)
    xb = x.astype(jnp.bfloat16)
    out_b = jax.block_until_ready(binary_activation(xb, kk, bias))
    ref_b = (jnp.tanh(xb.astype(jnp.float32) * kk) + bias).astype(jnp.bfloat16)
    assert out_b.dtype == jnp.bfloat16
    assert jnp.allclose(out_b.astype(jnp.float32), ref_b.astype(jnp.float32),
                        atol=1e-2), "bf16 path mismatch"

    # Odd shape that is NOT a multiple of 128 -> exercises the padded path.
    xo = jax.random.normal(jax.random.PRNGKey(1), (2, 3, 5, 7), jnp.float32)
    out_o = jax.block_until_ready(binary_activation(xo, kk, bias))
    ref_o = jnp.tanh(xo * kk) + bias
    assert out_o.shape == xo.shape
    assert jnp.allclose(out_o, ref_o, atol=1e-6), "padded path mismatch"

    print("KERNEL_OK")
</pallas_src>

<mosaic_0001>
module attributes {stable_mosaic.version = 11 : i64} {
  func.func @_tanh_kernel(%arg0: i32, %arg1: memref<1xf32, #tpu.memory_space<smem>>, %arg2: memref<1xf32, #tpu.memory_space<smem>>, %arg3: memref<2x1024xf32, #tpu.memory_space<vmem>>, %arg4: memref<2x1024xf32, #tpu.memory_space<vmem>>) attributes {dimension_semantics = [#tpu.dimension_semantics<parallel>], iteration_bounds = array<i64: 1>, scalar_prefetch = 0 : i64, scratch_operands = 0 : i64, tpu.core_type = #tpu.core_type<tc>, window_params = [{transform_indices = @transform_0, window_bounds = array<i64: 1>}, {transform_indices = @transform_1, window_bounds = array<i64: 1>}, {transform_indices = @transform_2, window_bounds = array<i64: 2, 1024>}, {transform_indices = @transform_3, window_bounds = array<i64: 2, 1024>}]} {
    %c0 = arith.constant 0 : index
    %0 = memref.load %arg1[%c0] : memref<1xf32, #tpu.memory_space<smem>>
    %c0_0 = arith.constant 0 : index
    %1 = memref.load %arg2[%c0_0] : memref<1xf32, #tpu.memory_space<smem>>
    %c0_1 = arith.constant 0 : index
    %c0_2 = arith.constant 0 : index
    %2 = vector.load %arg3[%c0_1, %c0_2] : memref<2x1024xf32, #tpu.memory_space<vmem>>, vector<2x1024xf32>
    %3 = vector.broadcast %0 : f32 to vector<2x1024xf32>
    %4 = arith.mulf %2, %3 : vector<2x1024xf32>
    %5 = math.tanh %4 : vector<2x1024xf32>
    %6 = vector.broadcast %1 : f32 to vector<2x1024xf32>
    %7 = arith.addf %5, %6 : vector<2x1024xf32>
    %c0_3 = arith.constant 0 : index
    %c0_4 = arith.constant 0 : index
    %8 = vector.load %arg4[%c0_3, %c0_4] : memref<2x1024xf32, #tpu.memory_space<vmem>>, vector<2x1024xf32>
    tpu.vector_store %arg4[%c0_3, %c0_4], %7 {strides = array<i32>} : memref<2x1024xf32, #tpu.memory_space<vmem>>, vector<2x1024xf32>,
    return
  }
  func.func @transform_0(%arg0: i32) -> i32 {
    %c0_i32 = arith.constant 0 : i32
    %c0_i32_0 = arith.constant 0 : i32
    return %c0_i32 : i32
  }
  func.func @transform_1(%arg0: i32) -> i32 {
    %c0_i32 = arith.constant 0 : i32
    %c0_i32_0 = arith.constant 0 : i32
    return %c0_i32 : i32
  }
  func.func @transform_2(%arg0: i32) -> (i32, i32) {
    %c0_i32 = arith.constant 0 : i32
    %c0_i32_0 = arith.constant 0 : i32
    return %arg0, %c0_i32 : i32, i32
  }
  func.func @transform_3(%arg0: i32) -> (i32, i32) {
    %c0_i32 = arith.constant 0 : i32
    %c0_i32_0 = arith.constant 0 : i32
    return %arg0, %c0_i32 : i32, i32
  }
}

</mosaic_0001>

<llo_original>
// kernel: tpu_custom_call.1
$region0: #{tpu_custom_call.1}
  #allocation0 [shape = 'u32[]', space=smem, size = 0x4, offset = 0x4, fixed_abs, tag = 'smem constant byte address 0x4 - core index']
  #allocation1 [shape = 'u32[144,128]{1,0:T(1,128)}', space=vmem, size = 0x12000, scoped, tag = 'internal scratch']
  #allocation2 [shape = 'f32[1]{0:T(128)S(6)}', space=smem, size = 0x200, scoped, tag = 'scoped memory for tpu_custom_call.1']
  #allocation3 [shape = 'f32[1]{0:T(128)S(6)}', space=smem, size = 0x200, scoped, tag = 'scoped memory for tpu_custom_call.1']
  %s0 = inlined_call_operand.<no memory space> [shape: f32[1], index: 0, kind: input, shape index: {}]
  %s1 = inlined_call_operand.<no memory space> [shape: f32[1], index: 1, kind: input, shape index: {}]
  %s2 = inlined_call_operand.hbm [shape: f32[2,1024], index: 2, kind: input, shape index: {}]
  %s3 = inlined_call_operand.hbm [shape: f32[2,1024], index: 3, kind: output, shape index: {}]
  %s4 = sld [smem:[#allocation0]]
  $region26: #{tpu_custom_call.1} parent=0
    _
  %s6 = ssub.s32 1, %s4
  %s7 = scalar_select 0, %s6, %s4
  %8 = sst [smem:[#allocation2]] %s0
  %9 = sst [smem:[#allocation3]] %s1
  $region1: #{tpu_custom_call.1} parent=0
    #allocation4 [shape = 'u8[8192]{0}', space=vmem, size = 0x2000, scoped, tag = 'input window, operand 2, single buffered']
    #allocation5 [shape = 's32[1]{0}', space=sflag, size = 0x4, scoped, tag = 'scoped memory for tpu_custom_call.1']
    #allocation6 [shape = 's32[1]{0}', space=sflag, size = 0x4, scoped, tag = 'scoped memory for tpu_custom_call.1']
    #allocation7 [shape = 'u8[8192]{0}', space=vmem, size = 0x2000, scoped, tag = 'output window, operand 0, single buffered']
    %10 = vsyncpa [#allocation5], 0
    %11 = vsyncpa [#allocation6], 0
    // Predicated region
    $region2: #{tpu_custom_call.1} parent=1 // pred_check
      _
    $region3: #{tpu_custom_call.1} parent=1 // pred_check_branch
      %13 = sbr.rel (0) target = $region5
    $region4: #{tpu_custom_call.1} parent=1 // pred_region
      _
    $region5: #{tpu_custom_call.1} parent=1 // pred_fallthru
      _
    // Predicated region
    $region6: #{tpu_custom_call.1} parent=1 // pred_check
      _
    $region7: #{tpu_custom_call.1} parent=1 // pred_check_branch
      %15 = sbr.rel (0) target = $region9
    $region8: #{tpu_custom_call.1} parent=1 // pred_region
      _
    $region9: #{tpu_custom_call.1} parent=1 // pred_fallthru
      _
    // Predicated region
    $region10: #{tpu_custom_call.1} parent=1 // pred_check
      _
    $region11: #{tpu_custom_call.1} parent=1 // pred_check_branch
      %17 = sbr.rel (0) target = $region13
    $region12: #{tpu_custom_call.1} parent=1 // pred_region
      %s19 = ssub.s32 256, 256
      %20 = vsyncadd [#allocation5], %s19
      %s22 = sshll.u32 [#allocation4], 4
      %s23 = int_to_ptr.vmem [resolvable:$true] %s22
      %25 = dma.hbm_to_vmem [thread:$0]  %s2, 256, %s23, [#allocation5]
    $region13: #{tpu_custom_call.1} parent=1 // pred_fallthru
      _
    // Predicated region
    $region14: #{tpu_custom_call.1} parent=1 // pred_check
      _
    $region15: #{tpu_custom_call.1} parent=1 // pred_check_branch
      %27 = sbr.rel (0) target = $region17
    $region16: #{tpu_custom_call.1} parent=1 // pred_region
      %28 = dma.done [#allocation5], 256
    $region17: #{tpu_custom_call.1} parent=1 // pred_fallthru
      _
    %s29 = sld [smem:[#allocation2]]
    %s30 = sld [smem:[#allocation3]]
    %v31 = vld [vmem:[#allocation4] sm:$0xff]
    %v32 = vld [vmem:[#allocation4 + $0x8] sm:$0xff]
    %v33 = vstv %s29
    %v34 = vmul.f32 %v31, %v33
    %v35 = vmul.f32 %v32, %v33
    %v36 = vtanh.pop %v34
    %v37 = vtanh.pop %v35
    %v38 = vstv %s30
    %v39 = vadd.f32 %v36, %v38
    %v40 = vadd.f32 %v37, %v38
    %41 = vst [vmem:[#allocation7] sm:$0xff] %v39
    %42 = vst [vmem:[#allocation7 + $0x8] sm:$0xff] %v40
    // Predicated region
    $region18: #{tpu_custom_call.1} parent=1 // pred_check
      _
    $region19: #{tpu_custom_call.1} parent=1 // pred_check_branch
      %44 = sbr.rel (0) target = $region21
    $region20: #{tpu_custom_call.1} parent=1 // pred_region
      %s46 = ssub.s32 256, 256
      %47 = vsyncadd [#allocation6], %s46
      %s49 = sshll.u32 [#allocation7], 4
      %s50 = int_to_ptr.vmem [resolvable:$true] %s49
      %52 = dma.vmem_to_hbm [thread:$0]  %s50, 256, %s3, [#allocation6]
    $region21: #{tpu_custom_call.1} parent=1 // pred_fallthru
      _
    // Predicated region
    $region22: #{tpu_custom_call.1} parent=1 // pred_check
      _
    $region23: #{tpu_custom_call.1} parent=1 // pred_check_branch
      %54 = sbr.rel (0) target = $region25
    $region24: #{tpu_custom_call.1} parent=1 // pred_region
      %55 = dma.done [#allocation6], 256
    $region25: #{tpu_custom_call.1} parent=1 // pred_fallthru
      _
    %56 = vsyncpa [#allocation5], 1
    %57 = vsyncpa [#allocation6], 1

</llo_original>
